<compile_context>
chip_gen: v7x
topology: tpu7x:2x2x1
jax: 0.10.0
libtpu: 0.0.40
codegen_flags: <defaults>
</compile_context>

<pallas_src>
import functools

import jax
import jax.numpy as jnp
import numpy as np
from jax import lax
from jax.experimental import pallas as pl
from jax.experimental.pallas import tpu as pltpu

DROPOUT = 0.2


def _round_up(v: int, m: int) -> int:
    return (v + m - 1) // m * m


def make_ffn_kernel(use_dropout: bool, dropout_p: float):
    """Fused FFN kernel: x @ W1 + b1 -> ReLU -> @ W2 + b2 -> (dropout)."""
    scale = 1.0 / (1.0 - dropout_p) if dropout_p < 1.0 else 0.0
    # keep iff bits >= threshold, bits uniform over int32 => P(keep) = 1 - p (exact to 2^-32).
    thr_i32 = np.int32(int(round(dropout_p * (1 << 32))) - (1 << 31))

    def kernel(x_ref, w1_ref, b1_ref, w2_ref, b2_ref, *rest):
        if use_dropout:
            bits_ref, o_ref = rest
        else:
            (o_ref,) = rest
        # bf16 MXU inputs, f32 accumulation.
        xb = x_ref[...].astype(jnp.bfloat16)
        h = jnp.dot(xb, w1_ref[...], preferred_element_type=jnp.float32)
        h = jnp.maximum(h + b1_ref[...], 0.0)                       # bias + ReLU in f32
        y = jnp.dot(h.astype(jnp.bfloat16), w2_ref[...],
                    preferred_element_type=jnp.float32)
        y = y + b2_ref[...]
        if use_dropout:
            keep = bits_ref[...] >= thr_i32                          # int32 threshold compare
            y = jnp.where(keep, y * scale, 0.0)                      # inverted dropout
        o_ref[...] = y.astype(o_ref.dtype)

    return kernel


@functools.partial(jax.jit, static_argnames=("training", "tile_n"))
def feed_forward(x, w1, b1, w2, b2, dropout_key=None, *, training=False, tile_n=512):
    """x: (B, T, E) float32. w1: (E, 4E), b1: (1, 4E), w2: (4E, E), b2: (1, E)."""
    B, T, E = x.shape
    H = w1.shape[1]
    N = B * T
    assert tile_n % 8 == 0

    use_dropout = bool(training) and DROPOUT > 0.0
    if use_dropout and dropout_key is None:
        raise ValueError("training=True requires a dropout_key")

    # Pad embed / hidden dims to lane-dense multiples of 128 (zero padding is exact).
    Ep, Hp = _round_up(E, 128), _round_up(H, 128)
    pe, ph = Ep - E, Hp - H

    xf = x.reshape(N, E)
    if pe or ph:
        xf = jnp.pad(xf, ((0, 0), (0, pe)))
        w1 = jnp.pad(w1, ((0, pe), (0, ph)))
        b1 = jnp.pad(b1, ((0, 0), (0, ph)))
        w2 = jnp.pad(w2, ((0, ph), (0, pe)))
        b2 = jnp.pad(b2, ((0, 0), (0, pe)))

    # Weights in bf16 halve resident VMEM + DMA bytes; biases stay f32.
    w1b = w1.astype(jnp.bfloat16)
    w2b = w2.astype(jnp.bfloat16)

    tile = N if N <= tile_n else tile_n
    grid = (pl.cdiv(N, tile),)

    in_specs = [
        pl.BlockSpec((tile, Ep), lambda i: (i, 0)),   # x tile (pipelined)
        pl.BlockSpec((Ep, Hp), lambda i: (0, 0)),     # W1 resident
        pl.BlockSpec((1, Hp), lambda i: (0, 0)),      # b1 resident
        pl.BlockSpec((Hp, Ep), lambda i: (0, 0)),     # W2 resident
        pl.BlockSpec((1, Ep), lambda i: (0, 0)),      # b2 resident
    ]
    args = [xf, w1b, b1, w2b, b2]

    if use_dropout:
        bits_u32 = jax.random.bits(dropout_key, (N, Ep), dtype=jnp.uint32)
        bits = lax.bitcast_convert_type(bits_u32, jnp.int32)
        in_specs.append(pl.BlockSpec((tile, Ep), lambda i: (i, 0)))
        args.append(bits)

    # VMEM budget: resident params + double-buffered tiles + f32 hidden, with headroom.
    param_bytes = w1b.size * 2 + w2b.size * 2 + b1.size * 4 + b2.size * 4
    tile_bytes = 2 * 2 * tile * Ep * 4 + (2 * tile * Ep * 4 if use_dropout else 0)
    hidden_bytes = 2 * tile * Hp * 4
    vmem_limit = int(min(max(param_bytes + tile_bytes + hidden_bytes + (8 << 20), 32 << 20),
                         100 << 20))

    flops = 4 * N * Ep * Hp  # two matmuls, 2*M*K*N each
    bytes_accessed = (xf.size * 4 + N * Ep * 4 + param_bytes
                      + (N * Ep * 4 if use_dropout else 0))

    out = pl.pallas_call(
        make_ffn_kernel(use_dropout, DROPOUT),
        out_shape=jax.ShapeDtypeStruct((N, Ep), x.dtype),
        grid=grid,
        in_specs=in_specs,
        out_specs=pl.BlockSpec((tile, Ep), lambda i: (i, 0)),
        compiler_params=pltpu.CompilerParams(
            dimension_semantics=("parallel",),   # shard row tiles across TCs on v7x
            vmem_limit_bytes=vmem_limit,
        ),
        cost_estimate=pl.CostEstimate(
            flops=flops, transcendentals=0, bytes_accessed=int(bytes_accessed)),
    )(*args)

    if pe:
        out = out[:, :E]
    return out.reshape(B, T, E)


def init_params(key, embedding_dim):
    """PyTorch nn.Linear default init: U(-1/sqrt(fan_in), 1/sqrt(fan_in)); weights pre-transposed."""
    E = embedding_dim
    H = 4 * E
    k1, k2, k3, k4 = jax.random.split(key, 4)
    bound1 = 1.0 / np.sqrt(E)
    bound2 = 1.0 / np.sqrt(H)
    w1 = jax.random.uniform(k1, (E, H), jnp.float32, -bound1, bound1)
    b1 = jax.random.uniform(k2, (1, H), jnp.float32, -bound1, bound1)
    w2 = jax.random.uniform(k3, (H, E), jnp.float32, -bound2, bound2)
    b2 = jax.random.uniform(k4, (1, E), jnp.float32, -bound2, bound2)
    return w1, b1, w2, b2


def feed_forward_ref(x, w1, b1, w2, b2):
    """Pure-JAX reference (eval mode) mimicking the kernel's bf16 matmul inputs."""
    B, T, E = x.shape
    xf = x.reshape(B * T, E).astype(jnp.bfloat16)
    h = jnp.dot(xf, w1.astype(jnp.bfloat16), preferred_element_type=jnp.float32)
    h = jnp.maximum(h + b1[0], 0.0)
    y = jnp.dot(h.astype(jnp.bfloat16), w2.astype(jnp.bfloat16),
                preferred_element_type=jnp.float32) + b2[0]
    return y.reshape(B, T, E)


if __name__ == "__main__":
    root = jax.random.PRNGKey(0)

    # ---- Test 1: module-like small shapes (E=32 not 128-aligned; wrapper pads). ----
    B, T, E = 2, 8, 32
    kx, kp, kd, k2 = jax.random.split(root, 4)
    x = jax.random.normal(kx, (B, T, E), jnp.float32)
    w1, b1, w2, b2 = init_params(kp, E)

    y = feed_forward(x, w1, b1, w2, b2, training=False)
    y = jax.block_until_ready(y)
    y_ref = feed_forward_ref(x, w1, b1, w2, b2)
    np.testing.assert_allclose(np.asarray(y), np.asarray(y_ref), rtol=1e-2, atol=1e-2)

    # Training-mode forward exercises the fused dropout epilogue.
    y_tr = feed_forward(x, w1, b1, w2, b2, kd, training=True)
    y_tr = jax.block_until_ready(y_tr)
    y_tr_np, y_np = np.asarray(y_tr), np.asarray(y)
    kept = y_tr_np != 0.0
    frac_dropped = 1.0 - kept.mean()
    assert 0.05 < frac_dropped < 0.4, frac_dropped
    np.testing.assert_allclose(y_tr_np[kept], y_np[kept] / (1.0 - DROPOUT),
                               rtol=1e-4, atol=1e-5)

    # ---- Test 2: 128-aligned shapes with grid > 1 (pipelined, resident-weight path). ----
    B2, T2, E2 = 2, 128, 128
    kx2, kp2 = jax.random.split(k2)
    x2 = jax.random.normal(kx2, (B2, T2, E2), jnp.float32)
    p2 = init_params(kp2, E2)
    y2 = feed_forward(x2, *p2, training=False, tile_n=64)   # N=256 -> grid=(4,)
    y2 = jax.block_until_ready(y2)
    y2_ref = feed_forward_ref(x2, *p2)
    np.testing.assert_allclose(np.asarray(y2), np.asarray(y2_ref), rtol=1e-2, atol=1e-2)

    print("KERNEL_OK")
</pallas_src>

<mosaic_0001>
module attributes {stable_mosaic.version = 11 : i64} {
  func.func @kernel(%arg0: i32, %arg1: memref<16x128xf32, #tpu.memory_space<vmem>>, %arg2: memref<128x128xbf16, #tpu.memory_space<vmem>>, %arg3: memref<1x128xf32, #tpu.memory_space<vmem>>, %arg4: memref<128x128xbf16, #tpu.memory_space<vmem>>, %arg5: memref<1x128xf32, #tpu.memory_space<vmem>>, %arg6: memref<16x128xf32, #tpu.memory_space<vmem>>) attributes {dimension_semantics = [#tpu.dimension_semantics<parallel>], iteration_bounds = array<i64: 1>, scalar_prefetch = 0 : i64, scratch_operands = 0 : i64, tpu.core_type = #tpu.core_type<tc>, window_params = [{transform_indices = @transform_0, window_bounds = array<i64: 16, 128>}, {pipeline_mode = #tpu.pipeline_mode<synchronous>, transform_indices = @transform_1, window_bounds = array<i64: 128, 128>}, {pipeline_mode = #tpu.pipeline_mode<synchronous>, transform_indices = @transform_2, window_bounds = array<i64: 1, 128>}, {pipeline_mode = #tpu.pipeline_mode<synchronous>, transform_indices = @transform_3, window_bounds = array<i64: 128, 128>}, {pipeline_mode = #tpu.pipeline_mode<synchronous>, transform_indices = @transform_4, window_bounds = array<i64: 1, 128>}, {transform_indices = @transform_5, window_bounds = array<i64: 16, 128>}]} {
    %c0 = arith.constant 0 : index
    %c0_0 = arith.constant 0 : index
    %0 = vector.load %arg1[%c0, %c0_0] : memref<16x128xf32, #tpu.memory_space<vmem>>, vector<16x128xf32>
    %1 = arith.truncf %0 : vector<16x128xf32> to vector<16x128xbf16>
    %c0_1 = arith.constant 0 : index
    %c0_2 = arith.constant 0 : index
    %2 = vector.load %arg2[%c0_1, %c0_2] : memref<128x128xbf16, #tpu.memory_space<vmem>>, vector<128x128xbf16>
    %cst = arith.constant dense<0.000000e+00> : vector<16x128xf32>
    %3 = tpu.matmul %1, %2, %cst {dimension_numbers = #tpu.dot_dimension_numbers<[1], [0], [0], [1], [0, 0, 1, 1], [], []>} : vector<16x128xbf16>, vector<128x128xbf16>, vector<16x128xf32> -> vector<16x128xf32>
    %c0_3 = arith.constant 0 : index
    %c0_4 = arith.constant 0 : index
    %4 = vector.load %arg3[%c0_3, %c0_4] : memref<1x128xf32, #tpu.memory_space<vmem>>, vector<1x128xf32>
    %5 = vector.broadcast %4 : vector<1x128xf32> to vector<16x128xf32>
    %6 = arith.addf %3, %5 : vector<16x128xf32>
    %cst_5 = arith.constant 0.000000e+00 : f32
    %7 = vector.broadcast %cst_5 : f32 to vector<16x128xf32>
    %8 = arith.maximumf %6, %7 : vector<16x128xf32>
    %9 = arith.truncf %8 : vector<16x128xf32> to vector<16x128xbf16>
    %c0_6 = arith.constant 0 : index
    %c0_7 = arith.constant 0 : index
    %10 = vector.load %arg4[%c0_6, %c0_7] : memref<128x128xbf16, #tpu.memory_space<vmem>>, vector<128x128xbf16>
    %cst_8 = arith.constant dense<0.000000e+00> : vector<16x128xf32>
    %11 = tpu.matmul %9, %10, %cst_8 {dimension_numbers = #tpu.dot_dimension_numbers<[1], [0], [0], [1], [0, 0, 1, 1], [], []>} : vector<16x128xbf16>, vector<128x128xbf16>, vector<16x128xf32> -> vector<16x128xf32>
    %c0_9 = arith.constant 0 : index
    %c0_10 = arith.constant 0 : index
    %12 = vector.load %arg5[%c0_9, %c0_10] : memref<1x128xf32, #tpu.memory_space<vmem>>, vector<1x128xf32>
    %13 = vector.broadcast %12 : vector<1x128xf32> to vector<16x128xf32>
    %14 = arith.addf %11, %13 : vector<16x128xf32>
    %c0_11 = arith.constant 0 : index
    %c0_12 = arith.constant 0 : index
    %15 = vector.load %arg6[%c0_11, %c0_12] : memref<16x128xf32, #tpu.memory_space<vmem>>, vector<16x128xf32>
    tpu.vector_store %arg6[%c0_11, %c0_12], %14 {strides = array<i32>} : memref<16x128xf32, #tpu.memory_space<vmem>>, vector<16x128xf32>,
    return
  }
  func.func @transform_0(%arg0: i32) -> (i32, i32) {
    %c0_i32 = arith.constant 0 : i32
    %c0_i32_0 = arith.constant 0 : i32
    return %arg0, %c0_i32 : i32, i32
  }
  func.func @transform_1(%arg0: i32) -> (i32, i32) {
    %c0_i32 = arith.constant 0 : i32
    %c0_i32_0 = arith.constant 0 : i32
    %c0_i32_1 = arith.constant 0 : i32
    return %c0_i32, %c0_i32_0 : i32, i32
  }
  func.func @transform_2(%arg0: i32) -> (i32, i32) {
    %c0_i32 = arith.constant 0 : i32
    %c0_i32_0 = arith.constant 0 : i32
    %c0_i32_1 = arith.constant 0 : i32
    return %c0_i32, %c0_i32_0 : i32, i32
  }
  func.func @transform_3(%arg0: i32) -> (i32, i32) {
    %c0_i32 = arith.constant 0 : i32
    %c0_i32_0 = arith.constant 0 : i32
    %c0_i32_1 = arith.constant 0 : i32
    return %c0_i32, %c0_i32_0 : i32, i32
  }
  func.func @transform_4(%arg0: i32) -> (i32, i32) {
    %c0_i32 = arith.constant 0 : i32
    %c0_i32_0 = arith.constant 0 : i32
    %c0_i32_1 = arith.constant 0 : i32
    return %c0_i32, %c0_i32_0 : i32, i32
  }
  func.func @transform_5(%arg0: i32) -> (i32, i32) {
    %c0_i32 = arith.constant 0 : i32
    %c0_i32_0 = arith.constant 0 : i32
    return %arg0, %c0_i32 : i32, i32
  }
}

</mosaic_0001>

<llo_original>
// kernel: feed_forward.1
$region0: #{feed_forward.1}
  #allocation0 [shape = 'u32[]', space=smem, size = 0x4, offset = 0x4, fixed_abs, tag = 'smem constant byte address 0x4 - core index']
  #allocation1 [shape = 'u32[144,128]{1,0:T(1,128)}', space=vmem, size = 0x12000, scoped, tag = 'internal scratch']
  %s0 = inlined_call_operand.vmem [shape: f32[16,128], index: 0, kind: input, shape index: {}]
  %s1 = inlined_call_operand.vmem [shape: bf16[128,128], index: 1, kind: input, shape index: {}]
  %s2 = inlined_call_operand.vmem [shape: f32[1,128], index: 2, kind: input, shape index: {}]
  %s3 = inlined_call_operand.vmem [shape: bf16[128,128], index: 3, kind: input, shape index: {}]
  %s4 = inlined_call_operand.vmem [shape: f32[1,128], index: 4, kind: input, shape index: {}]
  %s5 = inlined_call_operand.vmem [shape: f32[16,128], index: 5, kind: output, shape index: {}]
  %s6 = sld [smem:[#allocation0]]
  $region30: #{feed_forward.1} parent=0
    _
  %s8 = ssub.s32 1, %s6
  %s9 = scalar_select 0, %s8, %s6
  // Predicated region
  $region2: #{feed_forward.1} parent=0 // pred_check
    _
  $region3: #{feed_forward.1} parent=0 // pred_check_branch
    %11 = sbr.rel (0) target = $region5
  $region4: #{feed_forward.1} parent=0 // pred_region
    _
  $region5: #{feed_forward.1} parent=0 // pred_fallthru
    _
  // Predicated region
  $region6: #{feed_forward.1} parent=0 // pred_check
    _
  $region7: #{feed_forward.1} parent=0 // pred_check_branch
    %13 = sbr.rel (0) target = $region9
  $region8: #{feed_forward.1} parent=0 // pred_region
    _
  $region9: #{feed_forward.1} parent=0 // pred_fallthru
    _
  // Predicated region
  $region10: #{feed_forward.1} parent=0 // pred_check
    _
  $region11: #{feed_forward.1} parent=0 // pred_check_branch
    %15 = sbr.rel (0) target = $region13
  $region12: #{feed_forward.1} parent=0 // pred_region
    _
  $region13: #{feed_forward.1} parent=0 // pred_fallthru
    _
  // Predicated region
  $region14: #{feed_forward.1} parent=0 // pred_check
    _
  $region15: #{feed_forward.1} parent=0 // pred_check_branch
    %17 = sbr.rel (0) target = $region17
  $region16: #{feed_forward.1} parent=0 // pred_region
    _
  $region17: #{feed_forward.1} parent=0 // pred_fallthru
    _
  // Predicated region
  $region18: #{feed_forward.1} parent=0 // pred_check
    _
  $region19: #{feed_forward.1} parent=0 // pred_check_branch
    %19 = sbr.rel (0) target = $region21
  $region20: #{feed_forward.1} parent=0 // pred_region
    _
  $region21: #{feed_forward.1} parent=0 // pred_fallthru
    _
  %v21 = vld [vmem:[%s0] sm:$0xff]
  %v22 = vld [vmem:[%s0 + $0x8] sm:$0xff]
  %v23 = vpack.c.bf16 %v22, %v21
  %v24 = vld [vmem:[%s1] sm:$0xf]
  %v25 = vld [vmem:[%s1 + $0x4] sm:$0xf]
  %v26 = vld [vmem:[%s1 + $0x8] sm:$0xf]
  %v27 = vld [vmem:[%s1 + $0xc] sm:$0xf]
  %v28 = vld [vmem:[%s1 + $0x10] sm:$0xf]
  %v29 = vld [vmem:[%s1 + $0x14] sm:$0xf]
  %v30 = vld [vmem:[%s1 + $0x18] sm:$0xf]
  %v31 = vld [vmem:[%s1 + $0x1c] sm:$0xf]
  %v32 = vld [vmem:[%s1 + $0x20] sm:$0xf]
  %v33 = vld [vmem:[%s1 + $0x24] sm:$0xf]
  %v34 = vld [vmem:[%s1 + $0x28] sm:$0xf]
  %v35 = vld [vmem:[%s1 + $0x2c] sm:$0xf]
  %v36 = vld [vmem:[%s1 + $0x30] sm:$0xf]
  %v37 = vld [vmem:[%s1 + $0x34] sm:$0xf]
  %v38 = vld [vmem:[%s1 + $0x38] sm:$0xf]
  %v39 = vld [vmem:[%s1 + $0x3c] sm:$0xf]
  %v40 = vld [vmem:[%s2] sm:$0x1]
  %v42 = vlaneseq
  %v43 = vshrl.u32 %v42, 7
  %v44 = vsub.s32 0, %v43
  %v45 = vrot.slane %v40, %v44
  %v63 = vunpack.c.l.b16 %v24
  %v64 = vunpack.c.l.b16 %v25
  %v65 = vunpack.c.l.b16 %v26
  %v66 = vunpack.c.l.b16 %v27
  %v67 = vunpack.c.l.b16 %v28
  %v68 = vunpack.c.l.b16 %v29
  %v69 = vunpack.c.l.b16 %v30
  %v70 = vunpack.c.l.b16 %v31
  %v71 = vunpack.c.l.b16 %v32
  %v72 = vunpack.c.l.b16 %v33
  %v73 = vunpack.c.l.b16 %v34
  %v74 = vunpack.c.l.b16 %v35
  %v75 = vunpack.c.l.b16 %v36
  %v76 = vunpack.c.l.b16 %v37
  %v77 = vunpack.c.l.b16 %v38
  %v78 = vunpack.c.l.b16 %v39
  %v79 = vpack.c.b16 %v64, %v63
  %v80 = vpack.c.b16 %v66, %v65
  %v81 = vpack.c.b16 %v68, %v67
  %v82 = vpack.c.b16 %v70, %v69
  %v83 = vpack.c.b16 %v72, %v71
  %v84 = vpack.c.b16 %v74, %v73
  %v85 = vpack.c.b16 %v76, %v75
  %v86 = vpack.c.b16 %v78, %v77
  %95 = vmatprep.subr.bf16.mxu0 0
  %96 = vmatpush1.bf16.msra.mxu0 %v79
  %97 = vmatprep.subr.bf16.mxu0 0
  %98 = vmatpush1.bf16.msra.mxu0 %v80
  %99 = vmatprep.subr.bf16.mxu0 0
  %100 = vmatpush1.bf16.msra.mxu0 %v81
  %101 = vmatprep.subr.bf16.mxu0 0
  %102 = vmatpush1.bf16.msra.mxu0 %v82
  %103 = vmatprep.subr.bf16.mxu0 0
  %104 = vmatpush1.bf16.msra.mxu0 %v83
  %105 = vmatprep.subr.bf16.mxu0 0
  %106 = vmatpush1.bf16.msra.mxu0 %v84
  %107 = vmatprep.subr.bf16.mxu0 0
  %108 = vmatpush1.bf16.msra.mxu0 %v85
  %109 = vmatprep.subr.bf16.mxu0 0
  %110 = vmatpush1.bf16.msra.mxu0 %v86
  %111 = vmatprep.subr.bf16.mxu0 0
  %112 = vmatpush1.bf16.msra.mxu0 0
  %113 = vmatprep.subr.bf16.mxu0 0
  %114 = vmatpush1.bf16.msra.mxu0 0
  %115 = vmatprep.subr.bf16.mxu0 0
  %116 = vmatpush1.bf16.msra.mxu0 0
  %117 = vmatprep.subr.bf16.mxu0 0
  %118 = vmatpush1.bf16.msra.mxu0 0
  %119 = vmatprep.subr.bf16.mxu0 0
  %120 = vmatpush1.bf16.msra.mxu0 0
  %121 = vmatprep.subr.bf16.mxu0 0
  %122 = vmatpush1.bf16.msra.mxu0 0
  %123 = vmatprep.subr.bf16.mxu0 0
  %124 = vmatpush1.bf16.msra.mxu0 0
  %125 = vmatprep.subr.bf16.mxu0 0
  %126 = vmatpush1.bf16.msra.mxu0 0
  %127 = vmatprep.mubr.bf16.mxu0 0
  %128 = vmatmul.mubr.bf16.gmra.mrb[0].mxu0 %v23
  %v129 = vpop.f32.mrb[0].mxu0
  %v130 = vadd.f32 %v45, %v129
  %v131 = vpop.f32.mrb[0].mxu0
  %v132 = vpop.f32.mrb[0].mxu0
  %v133 = vadd.f32 %v45, %v132
  %v134 = vpop.f32.mrb[0].mxu0
  %135 = vdwg.mxu0
  %v136 = vmax.f32 %v130, 0.0
  %v137 = vmax.f32 %v133, 0.0
  %v138 = vpack.c.bf16 %v137, %v136
  %v139 = vld [vmem:[%s3] sm:$0xf]
  %v140 = vld [vmem:[%s3 + $0x4] sm:$0xf]
  %v141 = vld [vmem:[%s3 + $0x8] sm:$0xf]
  %v142 = vld [vmem:[%s3 + $0xc] sm:$0xf]
  %v143 = vld [vmem:[%s3 + $0x10] sm:$0xf]
  %v144 = vld [vmem:[%s3 + $0x14] sm:$0xf]
  %v145 = vld [vmem:[%s3 + $0x18] sm:$0xf]
  %v146 = vld [vmem:[%s3 + $0x1c] sm:$0xf]
  %v147 = vld [vmem:[%s3 + $0x20] sm:$0xf]
  %v148 = vld [vmem:[%s3 + $0x24] sm:$0xf]
  %v149 = vld [vmem:[%s3 + $0x28] sm:$0xf]
  %v150 = vld [vmem:[%s3 + $0x2c] sm:$0xf]
  %v151 = vld [vmem:[%s3 + $0x30] sm:$0xf]
  %v152 = vld [vmem:[%s3 + $0x34] sm:$0xf]
  %v153 = vld [vmem:[%s3 + $0x38] sm:$0xf]
  %v154 = vld [vmem:[%s3 + $0x3c] sm:$0xf]
  %v155 = vld [vmem:[%s4] sm:$0x1]
  %v157 = vlaneseq
  %v158 = vshrl.u32 %v157, 7
  %v159 = vsub.s32 0, %v158
  %v160 = vrot.slane %v155, %v159
  %v178 = vunpack.c.l.b16 %v139
  %v179 = vunpack.c.l.b16 %v140
  %v180 = vunpack.c.l.b16 %v141
  %v181 = vunpack.c.l.b16 %v142
  %v182 = vunpack.c.l.b16 %v143
  %v183 = vunpack.c.l.b16 %v144
  %v184 = vunpack.c.l.b16 %v145
  %v185 = vunpack.c.l.b16 %v146
  %v186 = vunpack.c.l.b16 %v147
  %v187 = vunpack.c.l.b16 %v148
  %v188 = vunpack.c.l.b16 %v149
  %v189 = vunpack.c.l.b16 %v150
  %v190 = vunpack.c.l.b16 %v151
  %v191 = vunpack.c.l.b16 %v152
  %v192 = vunpack.c.l.b16 %v153
  %v193 = vunpack.c.l.b16 %v154
  %v194 = vpack.c.b16 %v179, %v178
  %v195 = vpack.c.b16 %v181, %v180
  %v196 = vpack.c.b16 %v183, %v182
  %v197 = vpack.c.b16 %v185, %v184
  %v198 = vpack.c.b16 %v187, %v186
  %v199 = vpack.c.b16 %v189, %v188
  %v200 = vpack.c.b16 %v191, %v190
  %v201 = vpack.c.b16 %v193, %v192
  %210 = vmatprep.subr.bf16.mxu0 0
  %211 = vmatpush1.bf16.msra.mxu0 %v194
  %212 = vmatprep.subr.bf16.mxu0 0
  %213 = vmatpush1.bf16.msra.mxu0 %v195
  %214 = vmatprep.subr.bf16.mxu0 0
  %215 = vmatpush1.bf16.msra.mxu0 %v196
  %216 = vmatprep.subr.bf16.mxu0 0
  %217 = vmatpush1.bf16.msra.mxu0 %v197
  %218 = vmatprep.subr.bf16.mxu0 0
  %219 = vmatpush1.bf16.msra.mxu0 %v198
  %220 = vmatprep.subr.bf16.mxu0 0
  %221 = vmatpush1.bf16.msra.mxu0 %v199
  %222 = vmatprep.subr.bf16.mxu0 0
  %223 = vmatpush1.bf16.msra.mxu0 %v200
  %224 = vmatprep.subr.bf16.mxu0 0
  %225 = vmatpush1.bf16.msra.mxu0 %v201
  %226 = vmatprep.subr.bf16.mxu0 0
  %227 = vmatpush1.bf16.msra.mxu0 0
  %228 = vmatprep.subr.bf16.mxu0 0
  %229 = vmatpush1.bf16.msra.mxu0 0
  %230 = vmatprep.subr.bf16.mxu0 0
  %231 = vmatpush1.bf16.msra.mxu0 0
  %232 = vmatprep.subr.bf16.mxu0 0
  %233 = vmatpush1.bf16.msra.mxu0 0
  %234 = vmatprep.subr.bf16.mxu0 0
  %235 = vmatpush1.bf16.msra.mxu0 0
  %236 = vmatprep.subr.bf16.mxu0 0
  %237 = vmatpush1.bf16.msra.mxu0 0
  %238 = vmatprep.subr.bf16.mxu0 0
  %239 = vmatpush1.bf16.msra.mxu0 0
  %240 = vmatprep.subr.bf16.mxu0 0
  %241 = vmatpush1.bf16.msra.mxu0 0
  %242 = vmatprep.mubr.bf16.mxu0 0
  %243 = vmatmul.mubr.bf16.gmra.mrb[0].mxu0 %v138
  %v244 = vpop.f32.mrb[0].mxu0
  %v245 = vadd.f32 %v160, %v244
  %v246 = vpop.f32.mrb[0].mxu0
  %v247 = vpop.f32.mrb[0].mxu0
  %v248 = vadd.f32 %v160, %v247
  %v249 = vpop.f32.mrb[0].mxu0
  %250 = vdwg.mxu0
  %251 = vst [vmem:[%s5] sm:$0xff] %v245
  %252 = vst [vmem:[%s5 + $0x8] sm:$0xff] %v248
  // Predicated region
  $region22: #{feed_forward.1} parent=0 // pred_check
    _
  $region23: #{feed_forward.1} parent=0 // pred_check_branch
    %254 = sbr.rel (0) target = $region25
  $region24: #{feed_forward.1} parent=0 // pred_region
    _
  $region25: #{feed_forward.1} parent=0 // pred_fallthru
    _
  // Predicated region
  $region26: #{feed_forward.1} parent=0 // pred_check
    _
  $region27: #{feed_forward.1} parent=0 // pred_check_branch
    %256 = sbr.rel (0) target = $region29
  $region28: #{feed_forward.1} parent=0 // pred_region
    _
  $region29: #{feed_forward.1} parent=0 // pred_fallthru
    _

</llo_original>
